<compile_context>
chip_gen: v5e
topology: v5e:2x2
jax: 0.10.0
libtpu: 0.0.40
codegen_flags: <defaults>
</compile_context>

<pallas_src>
import jax
import jax.numpy as jnp
import numpy as np
from jax.experimental import pallas as pl
from jax.experimental.pallas import tpu as pltpu

EPS = 1e-5      # PyTorch BatchNorm2d default
LANE = 128      # TPU lane width
TM = 256        # row tile over M = N*H*W (kept modest so the small demo
                # shapes still exercise a real multi-step grid; scale up to
                # 512-2048 for production shapes, staying inside scoped VMEM)


def _round_up(x, m):
    return (x + m - 1) // m * m


# ---------------------------------------------------------------------------
# Kernel 1: one-pass BN statistics (sum, sum of squares) over row tiles of M.
# ---------------------------------------------------------------------------
def _stats_kernel(x_ref, sum_ref, sq_ref, s_acc, q_acc):
    i = pl.program_id(0)

    @pl.when(i == 0)
    def _():
        s_acc[...] = jnp.zeros_like(s_acc)
        q_acc[...] = jnp.zeros_like(q_acc)

    x = x_ref[...]                                     # (TM, Cp) f32
    s_acc[...] += jnp.sum(x, axis=0, keepdims=True)
    q_acc[...] += jnp.sum(x * x, axis=0, keepdims=True)

    @pl.when(i == pl.num_programs(0) - 1)
    def _():
        sum_ref[...] = s_acc[...]
        sq_ref[...] = q_acc[...]


def _batch_stats(xm, Cp):
    Mp = xm.shape[0]
    return pl.pallas_call(
        _stats_kernel,
        grid=(Mp // TM,),
        in_specs=[pl.BlockSpec((TM, Cp), lambda i: (i, 0))],
        out_specs=[pl.BlockSpec((1, Cp), lambda i: (0, 0)),
                   pl.BlockSpec((1, Cp), lambda i: (0, 0))],
        out_shape=[jax.ShapeDtypeStruct((1, Cp), jnp.float32),
                   jax.ShapeDtypeStruct((1, Cp), jnp.float32)],
        scratch_shapes=[pltpu.VMEM((1, Cp), jnp.float32),
                        pltpu.VMEM((1, Cp), jnp.float32)],
        compiler_params=pltpu.CompilerParams(
            dimension_semantics=("arbitrary",)),
    )(xm)


# ---------------------------------------------------------------------------
# Kernel 2: BN affine + ReLU  (f32 math, bf16 lane-dense output)
# ---------------------------------------------------------------------------
def _bn_relu_kernel(x_ref, scale_ref, shift_ref, o_ref):
    a = jnp.maximum(x_ref[...] * scale_ref[...] + shift_ref[...], 0.0)
    o_ref[...] = a.astype(o_ref.dtype)


def _bn_relu(xm, scale, shift, Cp):
    Mp = xm.shape[0]
    return pl.pallas_call(
        _bn_relu_kernel,
        grid=(Mp // TM,),
        in_specs=[pl.BlockSpec((TM, Cp), lambda i: (i, 0)),
                  pl.BlockSpec((1, Cp), lambda i: (0, 0)),
                  pl.BlockSpec((1, Cp), lambda i: (0, 0))],
        out_specs=pl.BlockSpec((TM, Cp), lambda i: (i, 0)),
        out_shape=jax.ShapeDtypeStruct((Mp, Cp), jnp.bfloat16),
        compiler_params=pltpu.CompilerParams(
            dimension_semantics=("parallel",)),
    )(xm, scale, shift)


# ---------------------------------------------------------------------------
# Kernel 3: 3x3 conv as a single im2col matmul (bf16 operands, f32 accum)
# ---------------------------------------------------------------------------
def _conv_matmul_kernel(p_ref, w_ref, o_ref):
    o_ref[...] = jnp.dot(p_ref[...], w_ref[...],
                         preferred_element_type=jnp.float32)


def _conv_matmul(patches, w_mat, Gp):
    Mp, K = patches.shape
    return pl.pallas_call(
        _conv_matmul_kernel,
        grid=(Mp // TM,),
        in_specs=[pl.BlockSpec((TM, K), lambda i: (i, 0)),
                  pl.BlockSpec((K, Gp), lambda i: (0, 0))],   # weight resident
        out_specs=pl.BlockSpec((TM, Gp), lambda i: (i, 0)),
        out_shape=jax.ShapeDtypeStruct((Mp, Gp), jnp.float32),
        compiler_params=pltpu.CompilerParams(
            dimension_semantics=("parallel",)),
    )(patches, w_mat)


# ---------------------------------------------------------------------------
# DenseLayer forward (Pallas): conv3x3(relu(bn(cat(inputs, channel))))
# ---------------------------------------------------------------------------
def dense_layer(params, *inputs):
    x = inputs[0] if len(inputs) == 1 else jnp.concatenate(inputs, axis=1)
    N, C, H, W = x.shape
    growth = params["w"].shape[-1]

    # NCHW -> NHWC, pad channels to a lane-dense multiple of 128.
    x = jnp.transpose(x, (0, 2, 3, 1)).astype(jnp.float32)
    Cp = _round_up(C, LANE)
    Gp = _round_up(growth, LANE)
    x = jnp.pad(x, ((0, 0), (0, 0), (0, 0), (0, Cp - C)))

    M = N * H * W
    Mp = _round_up(M, TM)
    xm = jnp.pad(x.reshape(M, Cp), ((0, Mp - M), (0, 0)))

    # --- BN batch statistics (one pass). Zero-padded rows / channels add
    #     nothing to sum or sumsq, and padded channels stay exactly zero
    #     through BN (beta_pad = 0) and contribute nothing to the conv.
    s, sq = _batch_stats(xm, Cp)
    mean = s / M
    var = jnp.maximum(sq / M - mean * mean, 0.0)          # biased variance
    gamma = jnp.pad(params["gamma"], (0, Cp - C), constant_values=1.0)
    beta = jnp.pad(params["beta"], (0, Cp - C))
    scale = gamma[None, :] * jax.lax.rsqrt(var + EPS)     # (1, Cp)
    shift = beta[None, :] - mean * scale                  # (1, Cp)

    # --- BN + ReLU, tiled over M, bf16 output.
    a = _bn_relu(xm, scale, shift, Cp)[:M].reshape(N, H, W, Cp)

    # --- im2col in the wrapper: SAME zero-pad + 9 shifted slabs concatenated
    #     on the channel axis (tap order k = dy*3 + dx matches packed weights).
    ap = jnp.pad(a, ((0, 0), (1, 1), (1, 1), (0, 0)))
    taps = [ap[:, dy:dy + H, dx:dx + W, :]
            for dy in range(3) for dx in range(3)]
    patches = jnp.concatenate(taps, axis=-1).reshape(M, 9 * Cp)
    patches = jnp.pad(patches, ((0, Mp - M), (0, 0)))

    # --- packed conv weight: HWIO (3,3,Cin,G) -> (9*Cp, Gp), bf16.
    w = jnp.pad(params["w"],
                ((0, 0), (0, 0), (0, Cp - C), (0, Gp - growth)))
    w_mat = w.reshape(9 * Cp, Gp).astype(jnp.bfloat16)

    out = _conv_matmul(patches, w_mat, Gp)
    out = out[:M, :growth].reshape(N, H, W, growth)
    return jnp.transpose(out, (0, 3, 1, 2))               # back to NCHW


# ---------------------------------------------------------------------------
# Pure-JAX reference (same math, XLA ops) for correctness checking
# ---------------------------------------------------------------------------
def ref_dense_layer(params, *inputs):
    x = inputs[0] if len(inputs) == 1 else jnp.concatenate(inputs, axis=1)
    x = jnp.transpose(x, (0, 2, 3, 1)).astype(jnp.float32)
    m = jnp.mean(x, axis=(0, 1, 2))
    v = jnp.mean((x - m) ** 2, axis=(0, 1, 2))
    y = jnp.maximum((x - m) * jax.lax.rsqrt(v + EPS) * params["gamma"]
                    + params["beta"], 0.0)
    out = jax.lax.conv_general_dilated(
        y, params["w"], (1, 1), "SAME",
        dimension_numbers=("NHWC", "HWIO", "NHWC"))
    return jnp.transpose(out, (0, 3, 1, 2))


def make_params(key, cin, growth):
    k1, k2, k3 = jax.random.split(key, 3)
    return dict(
        gamma=1.0 + 0.1 * jax.random.normal(k1, (cin,), jnp.float32),
        beta=0.1 * jax.random.normal(k2, (cin,), jnp.float32),
        w=jax.random.normal(k3, (3, 3, cin, growth), jnp.float32)
          / jnp.sqrt(9.0 * cin),
    )


# ---------------------------------------------------------------------------
if __name__ == "__main__":
    N, H, W = 2, 16, 16
    inchannel, growth = 4, 8

    key = jax.random.PRNGKey(0)
    key, kx, kp = jax.random.split(key, 3)
    x = jax.random.normal(kx, (N, inchannel, H, W), jnp.float32)
    params = make_params(kp, inchannel, growth)

    out = jax.block_until_ready(dense_layer(params, x))
    assert out.shape == (N, growth, H, W), out.shape
    ref = jax.block_until_ready(ref_dense_layer(params, x))
    np.testing.assert_allclose(np.asarray(out), np.asarray(ref),
                               atol=5e-2, rtol=5e-2)

    # Multi-input path of forward(*inputs): channel concat before BN.
    key, kx2, kp2 = jax.random.split(key, 3)
    x2 = jax.random.normal(kx2, (N, 8, H, W), jnp.float32)
    params2 = make_params(kp2, inchannel + 8, growth)
    out2 = jax.block_until_ready(dense_layer(params2, x, x2))
    ref2 = jax.block_until_ready(ref_dense_layer(params2, x, x2))
    assert out2.shape == (N, growth, H, W), out2.shape
    np.testing.assert_allclose(np.asarray(out2), np.asarray(ref2),
                               atol=5e-2, rtol=5e-2)

    print("KERNEL_OK")
</pallas_src>

<mosaic_0001>
module attributes {stable_mosaic.version = 11 : i64} {
  func.func @_stats_kernel(%arg0: i32, %arg1: memref<256x128xf32, #tpu.memory_space<vmem>>, %arg2: memref<1x128xf32, #tpu.memory_space<vmem>>, %arg3: memref<1x128xf32, #tpu.memory_space<vmem>>, %arg4: memref<1x128xf32, #tpu.memory_space<vmem>>, %arg5: memref<1x128xf32, #tpu.memory_space<vmem>>) attributes {dimension_semantics = [#tpu.dimension_semantics<arbitrary>], iteration_bounds = array<i64: 2>, scalar_prefetch = 0 : i64, scratch_operands = 2 : i64, tpu.core_type = #tpu.core_type<tc>, window_params = [{transform_indices = @transform_0, window_bounds = array<i64: 256, 128>}, {pipeline_mode = #tpu.pipeline_mode<synchronous>, transform_indices = @transform_1, window_bounds = array<i64: 1, 128>}, {pipeline_mode = #tpu.pipeline_mode<synchronous>, transform_indices = @transform_2, window_bounds = array<i64: 1, 128>}]} {
    %c0_i32 = arith.constant 0 : i32
    %0 = arith.cmpi eq, %arg0, %c0_i32 : i32
    %1 = arith.extui %0 : i1 to i32
    %c0_i32_0 = arith.constant 0 : i32
    %2 = arith.cmpi ne, %1, %c0_i32_0 : i32
    scf.if %2 {
      %cst_12 = arith.constant 0.000000e+00 : f32
      %18 = vector.broadcast %cst_12 : f32 to vector<1x128xf32>
      %c0_13 = arith.constant 0 : index
      %c0_14 = arith.constant 0 : index
      %19 = vector.load %arg4[%c0_13, %c0_14] : memref<1x128xf32, #tpu.memory_space<vmem>>, vector<1x128xf32>
      tpu.vector_store %arg4[%c0_13, %c0_14], %18 {strides = array<i32>} : memref<1x128xf32, #tpu.memory_space<vmem>>, vector<1x128xf32>,
      %cst_15 = arith.constant 0.000000e+00 : f32
      %20 = vector.broadcast %cst_15 : f32 to vector<1x128xf32>
      %c0_16 = arith.constant 0 : index
      %c0_17 = arith.constant 0 : index
      %21 = vector.load %arg5[%c0_16, %c0_17] : memref<1x128xf32, #tpu.memory_space<vmem>>, vector<1x128xf32>
      tpu.vector_store %arg5[%c0_16, %c0_17], %20 {strides = array<i32>} : memref<1x128xf32, #tpu.memory_space<vmem>>, vector<1x128xf32>,
    } else {
    }
    %c0 = arith.constant 0 : index
    %c0_1 = arith.constant 0 : index
    %3 = vector.load %arg1[%c0, %c0_1] : memref<256x128xf32, #tpu.memory_space<vmem>>, vector<256x128xf32>
    %c0_2 = arith.constant 0 : index
    %c0_3 = arith.constant 0 : index
    %4 = vector.load %arg4[%c0_2, %c0_3] : memref<1x128xf32, #tpu.memory_space<vmem>>, vector<1x128xf32>
    %cst = arith.constant dense<0.000000e+00> : vector<128xf32>
    %5 = vector.multi_reduction <add>, %3, %cst [0] : vector<256x128xf32> to vector<128xf32>
    %6 = vector.shape_cast %5 : vector<128xf32> to vector<1x128xf32>
    %7 = arith.addf %4, %6 : vector<1x128xf32>
    %c0_4 = arith.constant 0 : index
    %c0_5 = arith.constant 0 : index
    %8 = vector.load %arg4[%c0_4, %c0_5] : memref<1x128xf32, #tpu.memory_space<vmem>>, vector<1x128xf32>
    tpu.vector_store %arg4[%c0_4, %c0_5], %7 {strides = array<i32>} : memref<1x128xf32, #tpu.memory_space<vmem>>, vector<1x128xf32>,
    %c0_6 = arith.constant 0 : index
    %c0_7 = arith.constant 0 : index
    %9 = vector.load %arg5[%c0_6, %c0_7] : memref<1x128xf32, #tpu.memory_space<vmem>>, vector<1x128xf32>
    %10 = arith.mulf %3, %3 : vector<256x128xf32>
    %cst_8 = arith.constant dense<0.000000e+00> : vector<128xf32>
    %11 = vector.multi_reduction <add>, %10, %cst_8 [0] : vector<256x128xf32> to vector<128xf32>
    %12 = vector.shape_cast %11 : vector<128xf32> to vector<1x128xf32>
    %13 = arith.addf %9, %12 : vector<1x128xf32>
    %c0_9 = arith.constant 0 : index
    %c0_10 = arith.constant 0 : index
    %14 = vector.load %arg5[%c0_9, %c0_10] : memref<1x128xf32, #tpu.memory_space<vmem>>, vector<1x128xf32>
    tpu.vector_store %arg5[%c0_9, %c0_10], %13 {strides = array<i32>} : memref<1x128xf32, #tpu.memory_space<vmem>>, vector<1x128xf32>,
    %c1_i32 = arith.constant 1 : i32
    %15 = arith.cmpi eq, %arg0, %c1_i32 : i32
    %16 = arith.extui %15 : i1 to i32
    %c0_i32_11 = arith.constant 0 : i32
    %17 = arith.cmpi ne, %16, %c0_i32_11 : i32
    scf.if %17 {
      %c0_12 = arith.constant 0 : index
      %c0_13 = arith.constant 0 : index
      %18 = vector.load %arg4[%c0_12, %c0_13] : memref<1x128xf32, #tpu.memory_space<vmem>>, vector<1x128xf32>
      %c0_14 = arith.constant 0 : index
      %c0_15 = arith.constant 0 : index
      %19 = vector.load %arg2[%c0_14, %c0_15] : memref<1x128xf32, #tpu.memory_space<vmem>>, vector<1x128xf32>
      tpu.vector_store %arg2[%c0_14, %c0_15], %18 {strides = array<i32>} : memref<1x128xf32, #tpu.memory_space<vmem>>, vector<1x128xf32>,
      %c0_16 = arith.constant 0 : index
      %c0_17 = arith.constant 0 : index
      %20 = vector.load %arg5[%c0_16, %c0_17] : memref<1x128xf32, #tpu.memory_space<vmem>>, vector<1x128xf32>
      %c0_18 = arith.constant 0 : index
      %c0_19 = arith.constant 0 : index
      %21 = vector.load %arg3[%c0_18, %c0_19] : memref<1x128xf32, #tpu.memory_space<vmem>>, vector<1x128xf32>
      tpu.vector_store %arg3[%c0_18, %c0_19], %20 {strides = array<i32>} : memref<1x128xf32, #tpu.memory_space<vmem>>, vector<1x128xf32>,
    } else {
    }
    return
  }
  func.func @transform_0(%arg0: i32) -> (i32, i32) {
    %c0_i32 = arith.constant 0 : i32
    %c0_i32_0 = arith.constant 0 : i32
    return %arg0, %c0_i32 : i32, i32
  }
  func.func @transform_1(%arg0: i32) -> (i32, i32) {
    %c0_i32 = arith.constant 0 : i32
    %c0_i32_0 = arith.constant 0 : i32
    %c0_i32_1 = arith.constant 0 : i32
    return %c0_i32, %c0_i32_0 : i32, i32
  }
  func.func @transform_2(%arg0: i32) -> (i32, i32) {
    %c0_i32 = arith.constant 0 : i32
    %c0_i32_0 = arith.constant 0 : i32
    %c0_i32_1 = arith.constant 0 : i32
    return %c0_i32, %c0_i32_0 : i32, i32
  }
}

</mosaic_0001>

<llo_original>
// kernel: tpu_custom_call.1
$region0: #{tpu_custom_call.1}
  #allocation0 [shape = 'u32[]', space=smem, size = 0x4, offset = 0x4, fixed_abs, tag = 'smem constant byte address 0x4 - core index']
  #allocation1 [shape = 'u32[72,128]{1,0:T(1,128)}', space=vmem, size = 0x9000, scoped, tag = 'internal scratch']
  #allocation2 [shape = 'f32[1,128]{1,0:T(1,128)}', space=vmem, size = 0x200, scoped, tag = 'scratch operand']
  #allocation3 [shape = 'f32[1,128]{1,0:T(1,128)}', space=vmem, size = 0x200, scoped, tag = 'scratch operand']
  %s0 = inlined_call_operand.hbm [shape: f32[512,128], index: 0, kind: input, shape index: {}]
  %s1 = inlined_call_operand.hbm [shape: f32[1,128], index: 1, kind: output, shape index: {0}]
  %s2 = inlined_call_operand.hbm [shape: f32[1,128], index: 2, kind: output, shape index: {1}]
  %3 = xla_tuple %s1, %s2
  %s4 = sld [smem:[#allocation0]]
  $region57: #{tpu_custom_call.1} parent=0
    _
  %s6 = ssub.s32 1, %s4
  %s7 = scalar_select 0, %s6, %s4
  $region1: #{tpu_custom_call.1} parent=0
    #allocation4 [shape = 'u8[262144]{0}', space=vmem, size = 0x40000, scoped, tag = 'input window, operand 0']
    #allocation5 [shape = 's32[2]{0}', space=sflag, size = 0x8, scoped, tag = 'scoped memory for tpu_custom_call.1']
    #allocation6 [shape = 's32[2]{0}', space=sflag, size = 0x8, scoped, tag = 'scoped memory for tpu_custom_call.1']
    #allocation7 [shape = 'u8[512]{0}', space=vmem, size = 0x400, scoped, tag = 'output window, operand 0, single buffered']
    #allocation8 [shape = 'u8[512]{0}', space=vmem, size = 0x400, scoped, tag = 'output window, operand 1, single buffered']
    #allocation9 [shape = 's32[1]{0}', space=sflag, size = 0x4, scoped, tag = 'scoped memory for tpu_custom_call.1']
    %8 = vsyncpa [#allocation5], 0
    %s9 = scalar_lea.sflag [#allocation5], 1
    %10 = vsyncpa %s9, 0
    %11 = vsyncpa [#allocation6], 0
    %12 = vsyncpa [#allocation9], 0
    loop: start=0, step=1, limit=4
    $region2: #{tpu_custom_call.1} parent=1 // loop_pre_header
      _
    $region3: #{tpu_custom_call.1} parent=1 // loop_header
      %s14 = sphi 0, %s18
      %p15 = scmp.ge.s32.totalorder %s14, 4
      %s24 = sphi 0, %s26
      %s27 = sphi 0, %s24
      %s28 = sphi 0, %s27
      %s44 = sphi 0, %s28
      %s48 = sphi 0, %s48
      %s50 = sphi 0, %s48
      %s51 = sphi 0, %s50
      %s65 = sphi 0, %s51
      %s69 = sphi 0, %s69
      %s71 = sphi 0, %s69
      %s72 = sphi 0, %s71
      %s86 = sphi 0, %s72
    $region4: #{tpu_custom_call.1} parent=1 // loop_header_branch
      %17 = sbr.rel (%p15) target = $region8
    $region5: #{tpu_custom_call.1} parent=1 // loop_body
      %s19 = ssub.s32 %s14, 1
      %s20 = ssub.s32 %s14, 2
      %s21 = sadd.s32 %s14, 1
      %s22 = ssub.s32 %s14, %s21
      %p23 = scmp.eq.s32.totalorder %s22, 0
      %s25 = sadd.s32 %s24, 1
      %s26 = scalar_select %p23, %s24, %s25
      %p29 = pneg %p23
      %p30 = scmp.eq.s32.totalorder %s14, 1
      %p31 = por %p29, %p30
      %p32 = scmp.ne.s32.totalorder %s24, %s27
      %p33 = scmp.eq.s32.totalorder %s14, 0
      %p34 = por %p32, %p33
      %p35 = scmp.ne.s32.totalorder %s24, %s27
      %p36 = scmp.eq.s32.totalorder %s19, 1
      %p37 = por %p35, %p36
      %p38 = scmp.ne.s32.totalorder %s27, %s28
      %p39 = scmp.eq.s32.totalorder %s19, 0
      %p40 = por %p38, %p39
      %p41 = scmp.ne.s32.totalorder %s27, %s28
      %p42 = scmp.eq.s32.totalorder %s20, 1
      %p43 = por %p41, %p42
      %p45 = scmp.ne.s32.totalorder %s28, %s44
      %p46 = scmp.eq.s32.totalorder %s20, 0
      %p47 = por %p45, %p46
      %s49 = sadd.s32 %s48, 1
      %p52 = scmp.eq.s32.totalorder %s14, 1
      %p53 = scmp.ne.s32.totalorder %s48, %s50
      %p54 = scmp.eq.s32.totalorder %s14, 0
      %p55 = por %p53, %p54
      %p56 = scmp.ne.s32.totalorder %s48, %s50
      %p57 = scmp.eq.s32.totalorder %s19, 1
      %p58 = por %p56, %p57
      %p59 = scmp.ne.s32.totalorder %s50, %s51
      %p60 = scmp.eq.s32.totalorder %s19, 0
      %p61 = por %p59, %p60
      %p62 = scmp.ne.s32.totalorder %s50, %s51
      %p63 = scmp.eq.s32.totalorder %s20, 1
      %p64 = por %p62, %p63
      %p66 = scmp.ne.s32.totalorder %s51, %s65
      %p67 = scmp.eq.s32.totalorder %s20, 0
      %p68 = por %p66, %p67
      %s70 = sadd.s32 %s69, 1
      %p73 = scmp.eq.s32.totalorder %s14, 1
      %p74 = scmp.ne.s32.totalorder %s69, %s71
      %p75 = scmp.eq.s32.totalorder %s14, 0
      %p76 = por %p74, %p75
      %p77 = scmp.ne.s32.totalorder %s69, %s71
      %p78 = scmp.eq.s32.totalorder %s19, 1
      %p79 = por %p77, %p78
      %p80 = scmp.ne.s32.totalorder %s71, %s72
      %p81 = scmp.eq.s32.totalorder %s19, 0
      %p82 = por %p80, %p81
      %p83 = scmp.ne.s32.totalorder %s71, %s72
      %p84 = scmp.eq.s32.totalorder %s20, 1
      %p85 = por %p83, %p84
      %p87 = scmp.ne.s32.totalorder %s72, %s86
      %p88 = scmp.eq.s32.totalorder %s20, 0
      %p89 = por %p87, %p88
      %p90 = scmp.le.s32.totalorder 1, %s14
      %p91 = scmp.lt.s32.totalorder %s14, 3
      %p92 = pnand %p90, %p91
      %p93 = pneg %p92
      // Predicated region
      $region9: #{tpu_custom_call.1} parent=5 // pred_check
        _
      $region10: #{tpu_custom_call.1} parent=5 // pred_check_branch
        %95 = sbr.rel (%p92) target = $region12
      $region11: #{tpu_custom_call.1} parent=5 // pred_region
        %s96 = ssub.s32 %s14, 1
      $region12: #{tpu_custom_call.1} parent=5 // pred_fallthru
        _
      %p97 = scmp.lt.s32.totalorder %s14, 2
      // Predicated region
      $region13: #{tpu_custom_call.1} parent=5 // pred_check
        %p98 = pneg %p97
      $region14: #{tpu_custom_call.1} parent=5 // pred_check_branch
        %100 = sbr.rel (%p98) target = $region16
      $region15: #{tpu_custom_call.1} parent=5 // pred_region
        // Predicated region
        $region17: #{tpu_custom_call.1} parent=15 // pred_check
          %p101 = pneg %p34
        $region18: #{tpu_custom_call.1} parent=15 // pred_check_branch
          %103 = sbr.rel (%p101) target = $region20
        $region19: #{tpu_custom_call.1} parent=15 // pred_region
          %s104 = sand.u32 %s24, 1
          %s105 = scalar_lea.sflag [#allocation5], %s104
          %s106 = sand.u32 %s24, 1
          %s107 = smul.addr %s106, 256
          %s108 = scalar_lea.vmem [#allocation4], %s107
          %s109 = smul.u32 32, %s14
          %111 = vsyncadd %s105, 0
          %s112 = smul.addr %s109, 8
          %s113 = scalar_lea.hbm %s0, %s112
          %s114 = sshll.u32 %s113, 4
          %s115 = int_to_ptr.hbm [resolvable:$true] %s114
          %s116 = sshll.u32 %s108, 4
          %s117 = int_to_ptr.vmem [resolvable:$true] %s116
          %122 = dma.hbm_to_vmem [thread:$0]  %s115, 4096, %s117, %s105, 128, 128, 8
        $region20: #{tpu_custom_call.1} parent=15 // pred_fallthru
          _
      $region16: #{tpu_custom_call.1} parent=5 // pred_fallthru
        _
      %p123 = scmp.le.s32.totalorder 1, %s14
      %p124 = scmp.lt.s32.totalorder %s14, 3
      %p125 = pnand %p123, %p124
      %p126 = pneg %p125
      // Predicated region
      $region21: #{tpu_custom_call.1} parent=5 // pred_check
        _
      $region22: #{tpu_custom_call.1} parent=5 // pred_check_branch
        %128 = sbr.rel (%p125) target = $region24
      $region23: #{tpu_custom_call.1} parent=5 // pred_region
        %s129 = ssub.s32 %s14, 1
        %s130 = sand.u32 %s27, 1
        %s131 = scalar_lea.sflag [#allocation5], %s130
        %s132 = sand.u32 %s27, 1
        %s133 = smul.addr %s132, 256
        %s134 = scalar_lea.vmem [#allocation4], %s133
        // Predicated region
        $region25: #{tpu_custom_call.1} parent=23 // pred_check
          %p135 = pneg %p40
        $region26: #{tpu_custom_call.1} parent=23 // pred_check_branch
          %137 = sbr.rel (%p135) target = $region28
        $region27: #{tpu_custom_call.1} parent=23 // pred_region
          %139 = dma.done %s131, 4096
        $region28: #{tpu_custom_call.1} parent=23 // pred_fallthru
          _
        %s140 = sand.u32 %s27, 1
        %s141 = scalar_lea.sflag [#allocation5], %s140
        %s142 = sand.u32 %s27, 1
        %s143 = smul.addr %s142, 256
        %s144 = scalar_lea.vmem [#allocation4], %s143
        %p145 = pneg %p40
        %p146 = pneg %p37
        %p147 = pneg %p61
        %p148 = pneg %p58
        %p149 = pneg %p82
        %p150 = pneg %p79
        %s151 = smul.u32 32, %s19
        %p152 = scmp.eq.s32.totalorder %s19, 0
        // Predicated region
        $region29: #{tpu_custom_call.1} parent=23 // pred_check
          %p153 = pneg %p152
        $region30: #{tpu_custom_call.1} parent=23 // pred_check_branch
          %155 = sbr.rel (%p153) target = $region32
        $region31: #{tpu_custom_call.1} parent=23 // pred_region
          %156 = vst [vmem:[#allocation2] sm:$0x1] 0.0
          %157 = vst [vmem:[#allocation3] sm:$0x1] 0.0
        $region32: #{tpu_custom_call.1} parent=23 // pred_fallthru
          _
        %v158 = vld [vmem:[%s134] sm:$0xff]
        %v159 = vld [vmem:[%s134 + $0x8] sm:$0xff]
        %v160 = vld [vmem:[%s134 + $0x10] sm:$0xff]
        %v161 = vld [vmem:[%s134 + $0x18] sm:$0xff]
        %v162 = vld [vmem:[%s134 + $0x20] sm:$0xff]
        %v163 = vld [vmem:[%s134 + $0x28] sm:$0xff]
        %v164 = vld [vmem:[%s134 + $0x30] sm:$0xff]
        %v165 = vld [vmem:[%s134 + $0x38] sm:$0xff]
        %v166 = vld [vmem:[%s134 + $0x40] sm:$0xff]
        %v167 = vld [vmem:[%s134 + $0x48] sm:$0xff]
        %v168 = vld [vmem:[%s134 + $0x50] sm:$0xff]
        %v169 = vld [vmem:[%s134 + $0x58] sm:$0xff]
        %v170 = vld [vmem:[%s134 + $0x60] sm:$0xff]
        %v171 = vld [vmem:[%s134 + $0x68] sm:$0xff]
        %v172 = vld [vmem:[%s134 + $0x70] sm:$0xff]
        %v173 = vld [vmem:[%s134 + $0x78] sm:$0xff]
        %v174 = vld [vmem:[%s134 + $0x80] sm:$0xff]
        %v175 = vld [vmem:[%s134 + $0x88] sm:$0xff]
        %v176 = vld [vmem:[%s134 + $0x90] sm:$0xff]
        %v177 = vld [vmem:[%s134 + $0x98] sm:$0xff]
        %v178 = vld [vmem:[%s134 + $0xa0] sm:$0xff]
        %v179 = vld [vmem:[%s134 + $0xa8] sm:$0xff]
        %v180 = vld [vmem:[%s134 + $0xb0] sm:$0xff]
        %v181 = vld [vmem:[%s134 + $0xb8] sm:$0xff]
        %v182 = vld [vmem:[%s134 + $0xc0] sm:$0xff]
        %v183 = vld [vmem:[%s134 + $0xc8] sm:$0xff]
        %v184 = vld [vmem:[%s134 + $0xd0] sm:$0xff]
        %v185 = vld [vmem:[%s134 + $0xd8] sm:$0xff]
        %v186 = vld [vmem:[%s134 + $0xe0] sm:$0xff]
        %v187 = vld [vmem:[%s134 + $0xe8] sm:$0xff]
        %v188 = vld [vmem:[%s134 + $0xf0] sm:$0xff]
        %v189 = vld [vmem:[%s134 + $0xf8] sm:$0xff]
        %v190 = vld [vmem:[#allocation2] sm:$0x1]
        %v191 = vadd.f32 %v158, %v159
        %v192 = vadd.f32 %v191, %v160
        %v193 = vadd.f32 %v192, %v161
        %v194 = vadd.f32 %v193, %v162
        %v195 = vadd.f32 %v194, %v163
        %v196 = vadd.f32 %v195, %v164
        %v197 = vadd.f32 %v196, %v165
        %v198 = vadd.f32 %v197, %v166
        %v199 = vadd.f32 %v198, %v167
        %v200 = vadd.f32 %v199, %v168
        %v201 = vadd.f32 %v200, %v169
        %v202 = vadd.f32 %v201, %v170
        %v203 = vadd.f32 %v202, %v171
        %v204 = vadd.f32 %v203, %v172
        %v205 = vadd.f32 %v204, %v173
        %v206 = vadd.f32 %v205, %v174
        %v207 = vadd.f32 %v206, %v175
        %v208 = vadd.f32 %v207, %v176
        %v209 = vadd.f32 %v208, %v177
        %v210 = vadd.f32 %v209, %v178
        %v211 = vadd.f32 %v210, %v179
        %v212 = vadd.f32 %v211, %v180
        %v213 = vadd.f32 %v212, %v181
        %v214 = vadd.f32 %v213, %v182
        %v215 = vadd.f32 %v214, %v183
        %v216 = vadd.f32 %v215, %v184
        %v217 = vadd.f32 %v216, %v185
        %v218 = vadd.f32 %v217, %v186
        %v219 = vadd.f32 %v218, %v187
        %v220 = vadd.f32 %v219, %v188
        %v221 = vadd.f32 %v220, %v189
        %v222 = vrot.slane %v221, 4
        %v223 = vadd.f32 %v221, %v222
        %v224 = vrot.slane %v223, 2
        %v225 = vadd.f32 %v223, %v224
        %v226 = vrot.slane %v225, 1
        %v227 = vadd.f32 %v225, %v226
        %v228 = vadd.f32 %v190, %v227
        %229 = vst [vmem:[#allocation2] sm:$0x1] %v228
        %v230 = vld [vmem:[#allocation3] sm:$0x1]
        %v231 = vmul.f32 %v158, %v158
        %v232 = vmul.f32 %v159, %v159
        %v233 = vmul.f32 %v160, %v160
        %v234 = vmul.f32 %v161, %v161
        %v235 = vmul.f32 %v162, %v162
        %v236 = vmul.f32 %v163, %v163
        %v237 = vmul.f32 %v164, %v164
        %v238 = vmul.f32 %v165, %v165
        %v239 = vmul.f32 %v166, %v166
        %v240 = vmul.f32 %v167, %v167
        %v241 = vmul.f32 %v168, %v168
        %v242 = vmul.f32 %v169, %v169
        %v243 = vmul.f32 %v170, %v170
        %v244 = vmul.f32 %v171, %v171
        %v245 = vmul.f32 %v172, %v172
        %v246 = vmul.f32 %v173, %v173
        %v247 = vmul.f32 %v174, %v174
        %v248 = vmul.f32 %v175, %v175
        %v249 = vmul.f32 %v176, %v176
        %v250 = vmul.f32 %v177, %v177
        %v251 = vmul.f32 %v178, %v178
        %v252 = vmul.f32 %v179, %v179
        %v253 = vmul.f32 %v180, %v180
        %v254 = vmul.f32 %v181, %v181
        %v255 = vmul.f32 %v182, %v182
        %v256 = vmul.f32 %v183, %v183
        %v257 = vmul.f32 %v184, %v184
        %v258 = vmul.f32 %v185, %v185
        %v259 = vmul.f32 %v186, %v186
        %v260 = vmul.f32 %v187, %v187
        %v261 = vmul.f32 %v188, %v188
        %v262 = vmul.f32 %v189, %v189
        %v263 = vadd.f32 %v231, %v232
        %v264 = vadd.f32 %v263, %v233
        %v265 = vadd.f32 %v264, %v234
        %v266 = vadd.f32 %v265, %v235
        %v267 = vadd.f32 %v266, %v236
        %v268 = vadd.f32 %v267, %v237
        %v269 = vadd.f32 %v268, %v238
        %v270 = vadd.f32 %v269, %v239
        %v271 = vadd.f32 %v270, %v240
        %v272 = vadd.f32 %v271, %v241
        %v273 = vadd.f32 %v272, %v242
        %v274 = vadd.f32 %v273, %v243
        %v275 = vadd.f32 %v274, %v244
        %v276 = vadd.f32 %v275, %v245
        %v277 = vadd.f32 %v276, %v246
        %v278 = vadd.f32 %v277, %v247
        %v279 = vadd.f32 %v278, %v248
        %v280 = vadd.f32 %v279, %v249
        %v281 = vadd.f32 %v280, %v250
        %v282 = vadd.f32 %v281, %v251
        %v283 = vadd.f32 %v282, %v252
        %v284 = vadd.f32 %v283, %v253
        %v285 = vadd.f32 %v284, %v254
        %v286 = vadd.f32 %v285, %v255
        %v287 = vadd.f32 %v286, %v256
        %v288 = vadd.f32 %v287, %v257
        %v289 = vadd.f32 %v288, %v258
        %v290 = vadd.f32 %v289, %v259
        %v291 = vadd.f32 %v290, %v260
        %v292 = vadd.f32 %v291, %v261
        %v293 = vadd.f32 %v292, %v262
        %v294 = vrot.slane %v293, 4
        %v295 = vadd.f32 %v293, %v294
        %v296 = vrot.slane %v295, 2
        %v297 = vadd.f32 %v295, %v296
        %v298 = vrot.slane %v297, 1
        %v299 = vadd.f32 %v297, %v298
        %v300 = vadd.f32 %v230, %v299
        %301 = vst [vmem:[#allocation3] sm:$0x1] %v300
        %p302 = scmp.eq.s32.totalorder %s19, 1
        // Predicated region
        $region33: #{tpu_custom_call.1} parent=23 // pred_check
          %p303 = pneg %p302
        $region34: #{tpu_custom_call.1} parent=23 // pred_check_branch
          %305 = sbr.rel (%p303) target = $region36
        $region35: #{tpu_custom_call.1} parent=23 // pred_region
          %v306 = vld [vmem:[#allocation2] sm:$0x1]
          %307 = vst [vmem:[#allocation7] sm:$0x1] %v306
          %v308 = vld [vmem:[#allocation3] sm:$0x1]
          %309 = vst [vmem:[#allocation8] sm:$0x1] %v308
        $region36: #{tpu_custom_call.1} parent=23 // pred_fallthru
          _
        // Predicated region
        $region37: #{tpu_custom_call.1} parent=23 // pred_check
          %p310 = pneg %p58
        $region38: #{tpu_custom_call.1} parent=23 // pred_check_branch
          %312 = sbr.rel (%p310) target = $region40
        $region39: #{tpu_custom_call.1} parent=23 // pred_region
          %314 = vsyncadd [#allocation6], 0
          %s316 = sshll.u32 [#allocation7], 4
          %s317 = int_to_ptr.vmem [resolvable:$true] %s316
          %s318 = sshll.u32 %s1, 4
          %s319 = int_to_ptr.hbm [resolvable:$true] %s318
          %321 = dma.vmem_to_hbm [thread:$0]  %s317, 16, %s319, [#allocation6]
        $region40: #{tpu_custom_call.1} parent=23 // pred_fallthru
          _
        // Predicated region
        $region41: #{tpu_custom_call.1} parent=23 // pred_check
          %p322 = pneg %p79
        $region42: #{tpu_custom_call.1} parent=23 // pred_check_branch
          %324 = sbr.rel (%p322) target = $region44
        $region43: #{tpu_custom_call.1} parent=23 // pred_region
          %326 = vsyncadd [#allocation9], 0
          %s328 = sshll.u32 [#allocation8], 4
          %s329 = int_to_ptr.vmem [resolvable:$true] %s328
          %s330 = sshll.u32 %s2, 4
          %s331 = int_to_ptr.hbm [resolvable:$true] %s330
          %333 = dma.vmem_to_hbm [thread:$0]  %s329, 16, %s331, [#allocation9]
        $region44: #{tpu_custom_call.1} parent=23 // pred_fallthru
          _
        // Predicated region
        $region45: #{tpu_custom_call.1} parent=23 // pred_check
          %p334 = pneg %p58
        $region46: #{tpu_custom_call.1} parent=23 // pred_check_branch
          %336 = sbr.rel (%p334) target = $region48
        $region47: #{tpu_custom_call.1} parent=23 // pred_region
          %338 = dma.done [#allocation6], 16
        $region48: #{tpu_custom_call.1} parent=23 // pred_fallthru
          _
        // Predicated region
        $region49: #{tpu_custom_call.1} parent=23 // pred_check
          %p339 = pneg %p79
        $region50: #{tpu_custom_call.1} parent=23 // pred_check_branch
          %341 = sbr.rel (%p339) target = $region52
        $region51: #{tpu_custom_call.1} parent=23 // pred_region
          %343 = dma.done [#allocation9], 16
        $region52: #{tpu_custom_call.1} parent=23 // pred_fallthru
          _
      $region24: #{tpu_custom_call.1} parent=5 // pred_fallthru
        _
      %p344 = scmp.le.s32.totalorder 2, %s14
      // Predicated region
      $region53: #{tpu_custom_call.1} parent=5 // pred_check
        %p345 = pneg %p344
      $region54: #{tpu_custom_call.1} parent=5 // pred_check_branch
        %347 = sbr.rel (%p345) target = $region56
      $region55: #{tpu_custom_call.1} parent=5 // pred_region
        %s348 = ssub.s32 %s14, 2
      $region56: #{tpu_custom_call.1} parent=5 // pred_fallthru
        _
    $region6: #{tpu_custom_call.1} parent=1 // loop_footer
      %s18 = sadd.s32 1, %s14
    $region7: #{tpu_custom_call.1} parent=1 // loop_footer_branch
      %13 = sbr.rel target = $region3
    $region8: #{tpu_custom_call.1} parent=1 // loop_exit
      _
    %349 = vsyncpa [#allocation5], 1
    %s350 = scalar_lea.sflag [#allocation5], 1
    %351 = vsyncpa %s350, 1
    %352 = vsyncpa [#allocation6], 1
    %s353 = scalar_lea.sflag [#allocation6], 1
    %354 = vsyncpa %s353, 1
    %355 = vsyncpa [#allocation9], 1

</llo_original>
